<compile_context>
chip_gen: v5e
topology: v5e:2x2
jax: 0.10.0
libtpu: 0.0.40
codegen_flags: <defaults>
</compile_context>

<pallas_src>
import jax
import jax.numpy as jnp
from jax.experimental import pallas as pl
from jax.experimental.pallas import tpu as pltpu

_LANES = 1024          # lane-dense slab width (multiple of 128)
_MAX_TILE_ROWS = 512   # (512, 1024) f32 = 2 MiB per block


def _cdiv(a, b):
    return -(-a // b)


def _make_kernel(task, use_bias):
    def kernel(x_ref, b_ref, o_ref):
        v = x_ref[...].astype(jnp.float32)
        if use_bias:
            v = v + b_ref[0]            # scalar SMEM read, VPU broadcast-add
        if task == "binary":
            v = jax.nn.sigmoid(v)       # EUP exp + reciprocal
        o_ref[...] = v.astype(o_ref.dtype)
    return kernel


def prediction_layer(x, bias=None, *, task="binary", use_bias=True,
                     min_pallas_size=16384):
    """Pallas implementation of PredictionLayer.forward.

    x    : (B, 1) (or any shape) float logits
    bias : (1,)   scalar parameter (required if use_bias=True)
    """
    if task not in ("binary", "multiclass", "regression"):
        raise ValueError("task must be binary,multiclass or regression")

    if not use_bias and task != "binary":
        return x  # identity

    # Tiny-input fast path: launch/DMA overhead dominates; let XLA fuse it.
    if x.size < min_pallas_size:
        out = x.astype(jnp.float32)
        if use_bias:
            out = out + jnp.asarray(bias, jnp.float32)
        if task == "binary":
            out = jax.nn.sigmoid(out)
        return out.astype(x.dtype)

    orig_shape = x.shape
    orig_dtype = x.dtype
    n = x.size

    # Repack into a lane-dense (rows, 1024) slab, padded so blocks tile exactly.
    rows = max(1, _cdiv(n, _LANES))
    if rows <= _MAX_TILE_ROWS:
        tile_rows = rows                # single block == full array dims
        grid_rows = 1
    else:
        tile_rows = _MAX_TILE_ROWS      # multiple of 8
        grid_rows = _cdiv(rows, tile_rows)
    rows_padded = grid_rows * tile_rows
    padded_n = rows_padded * _LANES

    x_flat = jnp.ravel(x)
    if padded_n != n:
        x_flat = jnp.pad(x_flat, (0, padded_n - n))
    x2d = x_flat.reshape(rows_padded, _LANES)

    if use_bias:
        b = jnp.asarray(bias, jnp.float32).reshape((1,))
    else:
        b = jnp.zeros((1,), jnp.float32)   # unused placeholder

    out2d = pl.pallas_call(
        _make_kernel(task, use_bias),
        out_shape=jax.ShapeDtypeStruct((rows_padded, _LANES), orig_dtype),
        grid=(grid_rows,),
        in_specs=[
            pl.BlockSpec((tile_rows, _LANES), lambda i: (i, 0)),
            pl.BlockSpec((1,), lambda i: (0,),
                         memory_space=pltpu.MemorySpace.SMEM),
        ],
        out_specs=pl.BlockSpec((tile_rows, _LANES), lambda i: (i, 0)),
        compiler_params=pltpu.CompilerParams(
            dimension_semantics=("parallel",)),
    )(x2d, b)

    return out2d.reshape(-1)[:n].reshape(orig_shape)


if __name__ == "__main__":
    key = jax.random.PRNGKey(0)

    # Small shape consistent with the module: per-example logit (batch, 1).
    batch = 8
    x = jax.random.normal(key, (batch, 1), dtype=jnp.float32)

    # Deterministic parameter init: bias = zeros((1,)), exactly as in __init__.
    bias = jnp.zeros((1,), dtype=jnp.float32)

    # Force the Pallas path even at this tiny size so the kernel is exercised.
    out = prediction_layer(x, bias, task="binary", use_bias=True,
                           min_pallas_size=0)
    out = jax.block_until_ready(out)
    ref = jax.nn.sigmoid(x + bias)
    assert out.shape == x.shape and out.dtype == x.dtype
    assert jnp.allclose(out, ref, atol=1e-6), "mismatch vs reference (small)"

    # Second check: non-multiple batch exercises lane packing + padding path.
    x2 = jax.random.normal(jax.random.fold_in(key, 1), (3000, 1),
                           dtype=jnp.float32)
    out2 = jax.block_until_ready(
        prediction_layer(x2, bias, task="binary", use_bias=True,
                         min_pallas_size=0))
    ref2 = jax.nn.sigmoid(x2 + bias)
    assert out2.shape == x2.shape and out2.dtype == x2.dtype
    assert jnp.allclose(out2, ref2, atol=1e-6), "mismatch vs reference (padded)"

    print("KERNEL_OK")
</pallas_src>

<mosaic_0001>
module attributes {stable_mosaic.version = 11 : i64} {
  func.func @kernel(%arg0: i32, %arg1: memref<1x1024xf32, #tpu.memory_space<vmem>>, %arg2: memref<1xf32, #tpu.memory_space<smem>>, %arg3: memref<1x1024xf32, #tpu.memory_space<vmem>>) attributes {dimension_semantics = [#tpu.dimension_semantics<parallel>], iteration_bounds = array<i64: 1>, scalar_prefetch = 0 : i64, scratch_operands = 0 : i64, tpu.core_type = #tpu.core_type<tc>, window_params = [{transform_indices = @transform_0, window_bounds = array<i64: 1, 1024>}, {transform_indices = @transform_1, window_bounds = array<i64: 1>}, {transform_indices = @transform_2, window_bounds = array<i64: 1, 1024>}]} {
    %c0 = arith.constant 0 : index
    %c0_0 = arith.constant 0 : index
    %0 = vector.load %arg1[%c0, %c0_0] : memref<1x1024xf32, #tpu.memory_space<vmem>>, vector<1x1024xf32>
    %c0_1 = arith.constant 0 : index
    %1 = memref.load %arg2[%c0_1] : memref<1xf32, #tpu.memory_space<smem>>
    %2 = vector.broadcast %1 : f32 to vector<1x1024xf32>
    %3 = arith.addf %0, %2 : vector<1x1024xf32>
    %4 = arith.negf %3 : vector<1x1024xf32>
    %5 = math.exp %4 : vector<1x1024xf32>
    %cst = arith.constant 1.000000e+00 : f32
    %6 = vector.broadcast %cst : f32 to vector<1x1024xf32>
    %7 = arith.addf %6, %5 : vector<1x1024xf32>
    %8 = arith.divf %6, %7 : vector<1x1024xf32>
    %c0_2 = arith.constant 0 : index
    %c0_3 = arith.constant 0 : index
    %9 = vector.load %arg3[%c0_2, %c0_3] : memref<1x1024xf32, #tpu.memory_space<vmem>>, vector<1x1024xf32>
    tpu.vector_store %arg3[%c0_2, %c0_3], %8 {strides = array<i32>} : memref<1x1024xf32, #tpu.memory_space<vmem>>, vector<1x1024xf32>,
    return
  }
  func.func @transform_0(%arg0: i32) -> (i32, i32) {
    %c0_i32 = arith.constant 0 : i32
    %c0_i32_0 = arith.constant 0 : i32
    return %arg0, %c0_i32 : i32, i32
  }
  func.func @transform_1(%arg0: i32) -> i32 {
    %c0_i32 = arith.constant 0 : i32
    %c0_i32_0 = arith.constant 0 : i32
    return %c0_i32 : i32
  }
  func.func @transform_2(%arg0: i32) -> (i32, i32) {
    %c0_i32 = arith.constant 0 : i32
    %c0_i32_0 = arith.constant 0 : i32
    return %arg0, %c0_i32 : i32, i32
  }
}

</mosaic_0001>

<llo_original>
// kernel: tpu_custom_call.1
$region0: #{tpu_custom_call.1}
  #allocation0 [shape = 'u32[]', space=smem, size = 0x4, offset = 0x4, fixed_abs, tag = 'smem constant byte address 0x4 - core index']
  #allocation1 [shape = 'u32[72,128]{1,0:T(1,128)}', space=vmem, size = 0x9000, scoped, tag = 'internal scratch']
  #allocation2 [shape = 'f32[1]{0:T(128)S(6)}', space=smem, size = 0x200, scoped, tag = 'scoped memory for tpu_custom_call.1']
  %s0 = inlined_call_operand.hbm [shape: f32[1,1024], index: 0, kind: input, shape index: {}]
  %s1 = inlined_call_operand.<no memory space> [shape: f32[1], index: 1, kind: input, shape index: {}]
  %s2 = inlined_call_operand.hbm [shape: f32[1,1024], index: 2, kind: output, shape index: {}]
  %s3 = sld [smem:[#allocation0]]
  $region22: #{tpu_custom_call.1} parent=0
    _
  %s5 = ssub.s32 1, %s3
  %s6 = scalar_select 0, %s5, %s3
  %7 = sst [smem:[#allocation2]] %s1
  $region1: #{tpu_custom_call.1} parent=0
    #allocation3 [shape = 'u8[4096]{0}', space=vmem, size = 0x1000, scoped, tag = 'input window, operand 0, single buffered']
    #allocation4 [shape = 's32[1]{0}', space=sflag, size = 0x4, scoped, tag = 'scoped memory for tpu_custom_call.1']
    #allocation5 [shape = 's32[1]{0}', space=sflag, size = 0x4, scoped, tag = 'scoped memory for tpu_custom_call.1']
    #allocation6 [shape = 'u8[4096]{0}', space=vmem, size = 0x1000, scoped, tag = 'output window, operand 0, single buffered']
    %8 = vsyncpa [#allocation4], 0
    %9 = vsyncpa [#allocation5], 0
    // Predicated region
    $region2: #{tpu_custom_call.1} parent=1 // pred_check
      _
    $region3: #{tpu_custom_call.1} parent=1 // pred_check_branch
      %11 = sbr.rel (0) target = $region5
    $region4: #{tpu_custom_call.1} parent=1 // pred_region
      %13 = vsyncadd [#allocation4], 0
      %s15 = sshll.u32 %s0, 4
      %s16 = int_to_ptr.hbm [resolvable:$true] %s15
      %s17 = sshll.u32 [#allocation3], 4
      %s18 = int_to_ptr.vmem [resolvable:$true] %s17
      %20 = dma.hbm_to_vmem [thread:$0]  %s16, 128, %s18, [#allocation4]
    $region5: #{tpu_custom_call.1} parent=1 // pred_fallthru
      _
    // Predicated region
    $region6: #{tpu_custom_call.1} parent=1 // pred_check
      _
    $region7: #{tpu_custom_call.1} parent=1 // pred_check_branch
      %22 = sbr.rel (0) target = $region9
    $region8: #{tpu_custom_call.1} parent=1 // pred_region
      _
    $region9: #{tpu_custom_call.1} parent=1 // pred_fallthru
      _
    // Predicated region
    $region10: #{tpu_custom_call.1} parent=1 // pred_check
      _
    $region11: #{tpu_custom_call.1} parent=1 // pred_check_branch
      %24 = sbr.rel (0) target = $region13
    $region12: #{tpu_custom_call.1} parent=1 // pred_region
      %26 = dma.done [#allocation4], 128
    $region13: #{tpu_custom_call.1} parent=1 // pred_fallthru
      _
    %v27 = vld [vmem:[#allocation3] sm:$0xff]
    %s28 = sld [smem:[#allocation2]]
    %v29 = vstv %s28
    %v30 = vadd.f32 %v27, %v29
    %v31 = vxor.u32 %v30, 2147483648
    %v32 = vmul.f32 %v31, 1.442695
    %v33 = vpow.pop %v32
    %v34 = vadd.f32 %v33, 1.0
    %v35 = vrcp.pop %v34
    %v36 = vmul.f32 %v34, %v35
    %v37 = vsub.f32 1.0, %v36
    %v38 = vmul.f32 %v35, %v37
    %v39 = vadd.f32 %v35, %v38
    %vm40 = vweird.f32 %v34
    %vm41 = vweird.f32 %v35
    %vm42 = vmor %vm40, %vm41
    %v43 = vsel %vm42, %v35, %v39
    %v44 = vand.u32 2147483647, %v34
    %vm45 = vcmp.eq.f32.partialorder %v44, 8.507059e+37
    %v46 = vand.u32 %v34, 2147483648
    %v47 = vor.u32 1.1754944e-38, %v46
    %v48 = vsel %vm45, %v47, %v43
    %v49 = vmul.f32 1.0, %v48
    %50 = vst [vmem:[#allocation6] sm:$0xff] %v49
    // Predicated region
    $region14: #{tpu_custom_call.1} parent=1 // pred_check
      _
    $region15: #{tpu_custom_call.1} parent=1 // pred_check_branch
      %52 = sbr.rel (0) target = $region17
    $region16: #{tpu_custom_call.1} parent=1 // pred_region
      %54 = vsyncadd [#allocation5], 0
      %s56 = sshll.u32 [#allocation6], 4
      %s57 = int_to_ptr.vmem [resolvable:$true] %s56
      %s58 = sshll.u32 %s2, 4
      %s59 = int_to_ptr.hbm [resolvable:$true] %s58
      %61 = dma.vmem_to_hbm [thread:$0]  %s57, 128, %s59, [#allocation5]
    $region17: #{tpu_custom_call.1} parent=1 // pred_fallthru
      _
    // Predicated region
    $region18: #{tpu_custom_call.1} parent=1 // pred_check
      _
    $region19: #{tpu_custom_call.1} parent=1 // pred_check_branch
      %63 = sbr.rel (0) target = $region21
    $region20: #{tpu_custom_call.1} parent=1 // pred_region
      %65 = dma.done [#allocation5], 128
    $region21: #{tpu_custom_call.1} parent=1 // pred_fallthru
      _
    %66 = vsyncpa [#allocation4], 1
    %67 = vsyncpa [#allocation5], 1

</llo_original>
